<compile_context>
chip_gen: v7x
topology: tpu7x:2x2x1
jax: 0.10.0
libtpu: 0.0.40
codegen_flags: <defaults>
</compile_context>

<pallas_src>
import functools

import jax
import jax.numpy as jnp
from jax.experimental import pallas as pl
from jax.experimental.pallas import tpu as pltpu


def _dwconv_kernel(x_ref, w_ref, b_ref, o_ref, halo_ref, *, kernel_size: int):
    """Causal depth-wise conv on one (tile_s, tile_c) tile of the (S, C) view.

    x_ref    : (tile_s, tile_c)        current input tile (pipelined)
    w_ref    : (K, tile_c)  float32    per-lane taps
    b_ref    : (1, tile_c)  float32    per-lane bias
    o_ref    : (tile_s, tile_c)        output tile (pipelined)
    halo_ref : (halo_alloc, tile_c)    rows [0, K-1): previous seq tile's tail
    """
    K = kernel_size
    halo = K - 1
    tile_s, tile_c = o_ref.shape
    i_s = pl.program_id(1)  # seq-tile index (innermost, sequential)

    x = x_ref[...]
    xf = x.astype(jnp.float32)
    w = w_ref[...]           # (K, tile_c), already f32
    b = b_ref[...]           # (1, tile_c), already f32

    if halo:
        # First seq tile of each channel block: the causal front-pad is zeros.
        @pl.when(i_s == 0)
        def _zero_halo():
            halo_ref[pl.ds(0, halo), :] = jnp.zeros((halo, tile_c), halo_ref.dtype)

        h = halo_ref[pl.ds(0, halo), :].astype(jnp.float32)   # (halo, tile_c)

    # Bulk: for tap j (shift = K-1-j) rows [shift, tile_s) come straight from the
    # loaded x; pltpu.roll (XLU, cheap) wraps the first `shift` rows which are
    # fixed up exactly below.
    acc = jnp.broadcast_to(b, (tile_s, tile_c))
    for j in range(K):
        shift = halo - j
        xs = xf if shift == 0 else pltpu.roll(xf, shift=shift, axis=0)
        acc = acc + xs * w[j:j + 1, :]
    o_ref[...] = acc.astype(o_ref.dtype)

    if halo:
        # Exact recompute of the first K-1 output rows using the carried history.
        for i in range(halo):
            r = b
            for j in range(K):
                m = i - halo + j                       # input row rel. to this tile
                if m < 0:
                    src = h[halo + m:halo + m + 1, :]
                else:
                    src = xf[m:m + 1, :]
                r = r + src * w[j:j + 1, :]
            o_ref[pl.ds(i, 1), :] = r.astype(o_ref.dtype)

        # Carry the last K-1 input rows forward as the next tile's history
        # (stored after all reads of the old history / output writeback).
        halo_ref[pl.ds(0, halo), :] = x[tile_s - halo:, :]


def _round_up(n: int, m: int) -> int:
    return -(-n // m) * m


def _choose_tile(n: int, cap: int, granule: int):
    """Largest tile <= cap that is a multiple of `granule`, preferring exact
    divisors of n (no padding); otherwise the choice minimizing padding.
    Returns (tile, n_padded)."""
    n_g = _round_up(n, granule)
    cap = max(granule, min((cap // granule) * granule, n_g))
    for d in range(cap, granule - 1, -granule):        # exact divisors first
        if n % d == 0:
            return d, n
    best_tile, best_n = cap, _round_up(n, cap)         # minimal-padding fallback
    for d in range(cap, granule - 1, -granule):
        p = _round_up(n, d)
        if p < best_n:
            best_tile, best_n = d, p
    return best_tile, best_n


def spatial_depthwise_conv(x, weight, bias, kernel_size: int, *,
                           target_block_bytes: int = 4 << 20):
    """x: (seq_len, batch, heads, d_k); weight: (K, d_k) taps; bias: (d_k,)."""
    S, B, H, D = x.shape
    K = kernel_size
    halo = K - 1
    assert weight.shape == (K, D) and bias.shape == (D,)
    C = B * H * D
    itemsize = jnp.dtype(x.dtype).itemsize
    min_sub = {4: 8, 2: 16, 1: 32}.get(itemsize, 8)    # sublane packing granule

    # ---- tile selection (big, lane-dense blocks; HBM-streaming kernel) ------
    # Channel tile: multiple of 128; keep >= 2 channel tiles when C allows so the
    # "parallel" axis can shard across v7x's two TensorCores.
    c_cap = 2048
    if C >= 256:
        c_cap = min(c_cap, max(128, ((C // 2) // 128) * 128))
    tile_c, C_pad = _choose_tile(C, c_cap, 128)

    # Seq tile: fill ~target_block_bytes per pipeline buffer given tile_c.
    s_cap = max(min_sub, target_block_bytes // (tile_c * itemsize))
    tile_s, S_pad = _choose_tile(S, s_cap, min_sub)
    if halo > tile_s:  # causal history must fit inside one previous tile
        tile_s = _round_up(halo, min_sub)
        S_pad = _round_up(S, tile_s)

    n_c = C_pad // tile_c
    n_s = S_pad // tile_s

    # ---- wrapper-side staging (free view + tiny weight tiling; pad only when
    #      the shape has no lane/sublane-friendly divisor) ---------------------
    x2 = x.reshape(S, C)                                # free row-major view
    if (S_pad, C_pad) != (S, C):
        x2 = jnp.pad(x2, ((0, S_pad - S), (0, C_pad - C)))
    # column c of the (S, C) view is channel d = c % D
    w2 = jnp.tile(weight.astype(jnp.float32), (1, B * H))        # (K, C) f32
    b2 = jnp.tile(bias.astype(jnp.float32), B * H)[None, :]      # (1, C) f32
    if C_pad != C:
        w2 = jnp.pad(w2, ((0, 0), (0, C_pad - C)))
        b2 = jnp.pad(b2, ((0, 0), (0, C_pad - C)))

    halo_alloc = _round_up(max(halo, 1), min_sub)
    block_bytes = tile_s * tile_c * itemsize
    vmem_bytes = (4 * block_bytes                        # x + out, double-buffered
                  + halo_alloc * tile_c * itemsize       # halo scratch
                  + 4 * (K + 1) * tile_c * 4             # taps + bias (dbl-buffered)
                  + (4 << 20))                           # headroom
    vmem_limit = int(min(max(vmem_bytes, 32 << 20), 64 << 20))

    out2 = pl.pallas_call(
        functools.partial(_dwconv_kernel, kernel_size=K),
        out_shape=jax.ShapeDtypeStruct((S_pad, C_pad), x.dtype),
        grid=(n_c, n_s),   # channels outer (parallel), seq inner (serial halo carry)
        in_specs=[
            pl.BlockSpec((tile_s, tile_c), lambda c, s: (s, c)),
            pl.BlockSpec((K, tile_c), lambda c, s: (0, c)),
            pl.BlockSpec((1, tile_c), lambda c, s: (0, c)),
        ],
        out_specs=pl.BlockSpec((tile_s, tile_c), lambda c, s: (s, c)),
        scratch_shapes=[pltpu.VMEM((halo_alloc, tile_c), x.dtype)],
        compiler_params=pltpu.CompilerParams(
            dimension_semantics=("parallel", "arbitrary"),
            vmem_limit_bytes=vmem_limit),
        cost_estimate=pl.CostEstimate(
            flops=int(2 * K * S_pad * C_pad),
            transcendentals=0,
            bytes_accessed=int(2 * S_pad * C_pad * itemsize + (K + 1) * C_pad * 4)),
    )(x2, w2, b2)

    if (S_pad, C_pad) != (S, C):
        out2 = out2[:S, :C]
    return out2.reshape(S, B, H, D)          # free view back


def _reference(x, weight, bias, kernel_size):
    """Pure-JAX reference of the PyTorch forward (causal depth-wise conv)."""
    S = x.shape[0]
    K = kernel_size
    xp = jnp.pad(x.astype(jnp.float32), ((K - 1, 0), (0, 0), (0, 0), (0, 0)))
    out = jnp.zeros(x.shape, jnp.float32) + bias.astype(jnp.float32)[None, None, None, :]
    for j in range(K):
        out = out + xp[j:j + S] * weight[j].astype(jnp.float32)[None, None, None, :]
    return out.astype(x.dtype)


def _run_case(key, shape, kernel_size, **kwargs):
    S, B, H, D = shape
    kx, kw, kb = jax.random.split(key, 3)
    x = jax.random.normal(kx, (S, B, H, D), dtype=jnp.float32)
    bound = 1.0 / (kernel_size ** 0.5)
    # PyTorch Conv1d weight is (d_k, 1, K); we store its taps as (K, d_k).
    weight = jax.random.uniform(kw, (kernel_size, D), jnp.float32, -bound, bound)
    bias = jax.random.uniform(kb, (D,), jnp.float32, -bound, bound)
    out = jax.block_until_ready(spatial_depthwise_conv(x, weight, bias, kernel_size, **kwargs))
    ref = _reference(x, weight, bias, kernel_size)
    assert out.shape == x.shape
    assert jnp.allclose(out, ref, atol=1e-5, rtol=1e-5), \
        float(jnp.max(jnp.abs(out.astype(jnp.float32) - ref.astype(jnp.float32))))


if __name__ == "__main__":
    key = jax.random.PRNGKey(0)
    k1, k2, k3 = jax.random.split(key, 3)

    # Case 1: the module's natural small shapes (C = 2*4*32 = 256 -> 2 channel tiles).
    _run_case(k1, (8, 2, 4, 32), kernel_size=3)

    # Case 2: force small blocks so the causal-halo carry across seq tiles and the
    # per-channel-block halo re-zero are exercised (grid = (2, 4)).
    _run_case(k2, (32, 2, 4, 32), kernel_size=3, target_block_bytes=4096)

    # Case 3: awkward, non-divisible shapes (S=10, C=144) -> pad-and-crop fallback.
    _run_case(k3, (10, 2, 3, 24), kernel_size=3, target_block_bytes=4096)

    print("KERNEL_OK")
</pallas_src>

<mosaic_0001>
module attributes {stable_mosaic.version = 11 : i64} {
  func.func @_dwconv_kernel(%arg0: i32, %arg1: i32, %arg2: memref<8x128xf32, #tpu.memory_space<vmem>>, %arg3: memref<3x128xf32, #tpu.memory_space<vmem>>, %arg4: memref<1x128xf32, #tpu.memory_space<vmem>>, %arg5: memref<8x128xf32, #tpu.memory_space<vmem>>, %arg6: memref<8x128xf32, #tpu.memory_space<vmem>>) attributes {dimension_semantics = [#tpu.dimension_semantics<parallel>, #tpu.dimension_semantics<arbitrary>], iteration_bounds = array<i64: 2, 1>, scalar_prefetch = 0 : i64, scratch_operands = 1 : i64, tpu.core_type = #tpu.core_type<tc>, window_params = [{transform_indices = @transform_0, window_bounds = array<i64: 8, 128>}, {transform_indices = @transform_1, window_bounds = array<i64: 3, 128>}, {transform_indices = @transform_2, window_bounds = array<i64: 1, 128>}, {transform_indices = @transform_3, window_bounds = array<i64: 8, 128>}]} {
    %c0 = arith.constant 0 : index
    %c0_0 = arith.constant 0 : index
    %0 = vector.load %arg2[%c0, %c0_0] : memref<8x128xf32, #tpu.memory_space<vmem>>, vector<8x128xf32>
    %c0_1 = arith.constant 0 : index
    %c0_2 = arith.constant 0 : index
    %1 = vector.load %arg3[%c0_1, %c0_2] : memref<3x128xf32, #tpu.memory_space<vmem>>, vector<3x128xf32>
    %c0_3 = arith.constant 0 : index
    %c0_4 = arith.constant 0 : index
    %2 = vector.load %arg4[%c0_3, %c0_4] : memref<1x128xf32, #tpu.memory_space<vmem>>, vector<1x128xf32>
    %c0_i32 = arith.constant 0 : i32
    %3 = arith.cmpi eq, %arg1, %c0_i32 : i32
    %4 = arith.extui %3 : i1 to i32
    %c0_i32_5 = arith.constant 0 : i32
    %5 = arith.cmpi ne, %4, %c0_i32_5 : i32
    scf.if %5 {
      %cst = arith.constant 0.000000e+00 : f32
      %52 = vector.broadcast %cst : f32 to vector<2x128xf32>
      %c0_15 = arith.constant 0 : index
      %c0_16 = arith.constant 0 : index
      %53 = vector.load %arg6[%c0_15, %c0_16] : memref<8x128xf32, #tpu.memory_space<vmem>>, vector<2x128xf32>
      tpu.vector_store %arg6[%c0_15, %c0_16], %52 {strides = array<i32>} : memref<8x128xf32, #tpu.memory_space<vmem>>, vector<2x128xf32>,
    } else {
    }
    %c0_6 = arith.constant 0 : index
    %c0_7 = arith.constant 0 : index
    %6 = vector.load %arg6[%c0_6, %c0_7] : memref<8x128xf32, #tpu.memory_space<vmem>>, vector<2x128xf32>
    %7 = vector.shape_cast %2 : vector<1x128xf32> to vector<1x128xf32>
    %8 = vector.broadcast %7 : vector<1x128xf32> to vector<8x128xf32>
    %c2_i32 = arith.constant 2 : i32
    %9 = tpu.dynamic_rotate %0 by %c2_i32 dim 0 : vector<8x128xf32>, i32 -> vector<8x128xf32>
    %10 = vector.extract_strided_slice %1 {offsets = [0, 0], sizes = [1, 128], strides = [1, 1]} : vector<3x128xf32> to vector<1x128xf32>
    %11 = vector.broadcast %10 : vector<1x128xf32> to vector<8x128xf32>
    %12 = arith.mulf %9, %11 : vector<8x128xf32>
    %13 = arith.addf %8, %12 : vector<8x128xf32>
    %c1_i32 = arith.constant 1 : i32
    %14 = tpu.dynamic_rotate %0 by %c1_i32 dim 0 : vector<8x128xf32>, i32 -> vector<8x128xf32>
    %15 = vector.extract_strided_slice %1 {offsets = [1, 0], sizes = [1, 128], strides = [1, 1]} : vector<3x128xf32> to vector<1x128xf32>
    %16 = vector.broadcast %15 : vector<1x128xf32> to vector<8x128xf32>
    %17 = arith.mulf %14, %16 : vector<8x128xf32>
    %18 = arith.addf %13, %17 : vector<8x128xf32>
    %19 = vector.extract_strided_slice %1 {offsets = [2, 0], sizes = [1, 128], strides = [1, 1]} : vector<3x128xf32> to vector<1x128xf32>
    %20 = vector.broadcast %19 : vector<1x128xf32> to vector<8x128xf32>
    %21 = arith.mulf %0, %20 : vector<8x128xf32>
    %22 = arith.addf %18, %21 : vector<8x128xf32>
    %c0_8 = arith.constant 0 : index
    %c0_9 = arith.constant 0 : index
    %23 = vector.load %arg5[%c0_8, %c0_9] : memref<8x128xf32, #tpu.memory_space<vmem>>, vector<8x128xf32>
    tpu.vector_store %arg5[%c0_8, %c0_9], %22 {strides = array<i32>} : memref<8x128xf32, #tpu.memory_space<vmem>>, vector<8x128xf32>,
    %24 = vector.extract_strided_slice %6 {offsets = [0, 0], sizes = [1, 128], strides = [1, 1]} : vector<2x128xf32> to vector<1x128xf32>
    %25 = vector.extract_strided_slice %1 {offsets = [0, 0], sizes = [1, 128], strides = [1, 1]} : vector<3x128xf32> to vector<1x128xf32>
    %26 = arith.mulf %24, %25 : vector<1x128xf32>
    %27 = arith.addf %2, %26 : vector<1x128xf32>
    %28 = vector.extract_strided_slice %6 {offsets = [1, 0], sizes = [1, 128], strides = [1, 1]} : vector<2x128xf32> to vector<1x128xf32>
    %29 = vector.extract_strided_slice %1 {offsets = [1, 0], sizes = [1, 128], strides = [1, 1]} : vector<3x128xf32> to vector<1x128xf32>
    %30 = arith.mulf %28, %29 : vector<1x128xf32>
    %31 = arith.addf %27, %30 : vector<1x128xf32>
    %32 = vector.extract_strided_slice %0 {offsets = [0, 0], sizes = [1, 128], strides = [1, 1]} : vector<8x128xf32> to vector<1x128xf32>
    %33 = vector.extract_strided_slice %1 {offsets = [2, 0], sizes = [1, 128], strides = [1, 1]} : vector<3x128xf32> to vector<1x128xf32>
    %34 = arith.mulf %32, %33 : vector<1x128xf32>
    %35 = arith.addf %31, %34 : vector<1x128xf32>
    %c0_10 = arith.constant 0 : index
    %c0_11 = arith.constant 0 : index
    %36 = vector.load %arg5[%c0_10, %c0_11] : memref<8x128xf32, #tpu.memory_space<vmem>>, vector<1x128xf32>
    tpu.vector_store %arg5[%c0_10, %c0_11], %35 {strides = array<i32>} : memref<8x128xf32, #tpu.memory_space<vmem>>, vector<1x128xf32>,
    %37 = vector.extract_strided_slice %6 {offsets = [1, 0], sizes = [1, 128], strides = [1, 1]} : vector<2x128xf32> to vector<1x128xf32>
    %38 = vector.extract_strided_slice %1 {offsets = [0, 0], sizes = [1, 128], strides = [1, 1]} : vector<3x128xf32> to vector<1x128xf32>
    %39 = arith.mulf %37, %38 : vector<1x128xf32>
    %40 = arith.addf %2, %39 : vector<1x128xf32>
    %41 = vector.extract_strided_slice %0 {offsets = [0, 0], sizes = [1, 128], strides = [1, 1]} : vector<8x128xf32> to vector<1x128xf32>
    %42 = vector.extract_strided_slice %1 {offsets = [1, 0], sizes = [1, 128], strides = [1, 1]} : vector<3x128xf32> to vector<1x128xf32>
    %43 = arith.mulf %41, %42 : vector<1x128xf32>
    %44 = arith.addf %40, %43 : vector<1x128xf32>
    %45 = vector.extract_strided_slice %0 {offsets = [1, 0], sizes = [1, 128], strides = [1, 1]} : vector<8x128xf32> to vector<1x128xf32>
    %46 = vector.extract_strided_slice %1 {offsets = [2, 0], sizes = [1, 128], strides = [1, 1]} : vector<3x128xf32> to vector<1x128xf32>
    %47 = arith.mulf %45, %46 : vector<1x128xf32>
    %48 = arith.addf %44, %47 : vector<1x128xf32>
    %c1 = arith.constant 1 : index
    %c0_12 = arith.constant 0 : index
    %49 = vector.load %arg5[%c1, %c0_12] : memref<8x128xf32, #tpu.memory_space<vmem>>, vector<1x128xf32>
    tpu.vector_store %arg5[%c1, %c0_12], %48 {strides = array<i32>} : memref<8x128xf32, #tpu.memory_space<vmem>>, vector<1x128xf32>,
    %50 = vector.extract_strided_slice %0 {offsets = [6, 0], sizes = [2, 128], strides = [1, 1]} : vector<8x128xf32> to vector<2x128xf32>
    %c0_13 = arith.constant 0 : index
    %c0_14 = arith.constant 0 : index
    %51 = vector.load %arg6[%c0_13, %c0_14] : memref<8x128xf32, #tpu.memory_space<vmem>>, vector<2x128xf32>
    tpu.vector_store %arg6[%c0_13, %c0_14], %50 {strides = array<i32>} : memref<8x128xf32, #tpu.memory_space<vmem>>, vector<2x128xf32>,
    return
  }
  func.func @transform_0(%arg0: i32, %arg1: i32) -> (i32, i32) {
    %c0_i32 = arith.constant 0 : i32
    return %arg1, %arg0 : i32, i32
  }
  func.func @transform_1(%arg0: i32, %arg1: i32) -> (i32, i32) {
    %c0_i32 = arith.constant 0 : i32
    %c0_i32_0 = arith.constant 0 : i32
    return %c0_i32, %arg0 : i32, i32
  }
  func.func @transform_2(%arg0: i32, %arg1: i32) -> (i32, i32) {
    %c0_i32 = arith.constant 0 : i32
    %c0_i32_0 = arith.constant 0 : i32
    return %c0_i32, %arg0 : i32, i32
  }
  func.func @transform_3(%arg0: i32, %arg1: i32) -> (i32, i32) {
    %c0_i32 = arith.constant 0 : i32
    return %arg1, %arg0 : i32, i32
  }
}

</mosaic_0001>

<llo_original>
// kernel: tpu_custom_call.1
$region0: #{tpu_custom_call.1}
  #allocation0 [shape = 'u32[]', space=smem, size = 0x4, offset = 0x4, fixed_abs, tag = 'smem constant byte address 0x4 - core index']
  #allocation1 [shape = 'u32[144,128]{1,0:T(1,128)}', space=vmem, size = 0x12000, scoped, tag = 'internal scratch']
  #allocation2 [shape = 'f32[8,128]{1,0:T(8,128)}', space=vmem, size = 0x1000, scoped, tag = 'scratch operand']
  %s0 = inlined_call_operand.hbm [shape: f32[8,256], index: 0, kind: input, shape index: {}]
  %s1 = inlined_call_operand.hbm [shape: f32[3,256], index: 1, kind: input, shape index: {}]
  %s2 = inlined_call_operand.vmem [shape: f32[1,256], index: 2, kind: input, shape index: {}]
  %s3 = inlined_call_operand.hbm [shape: f32[8,256], index: 3, kind: output, shape index: {}]
  %s4 = sld [smem:[#allocation0]]
  $region57: #{tpu_custom_call.1} parent=0
    _
  %s6 = ssub.s32 1, %s4
  %s7 = scalar_select 0, %s6, %s4
  $region1: #{tpu_custom_call.1} parent=0
    #allocation3 [shape = 'u8[8192]{0}', space=vmem, size = 0x2000, scoped, tag = 'input window, operand 0']
    #allocation4 [shape = 's32[2]{0}', space=sflag, size = 0x8, scoped, tag = 'scoped memory for tpu_custom_call.1']
    #allocation5 [shape = 's32[2]{0}', space=sflag, size = 0x8, scoped, tag = 'scoped memory for tpu_custom_call.1']
    #allocation6 [shape = 'u8[4096]{0}', space=vmem, size = 0x1000, scoped, tag = 'input window, operand 1']
    #allocation7 [shape = 's32[2]{0}', space=sflag, size = 0x8, scoped, tag = 'scoped memory for tpu_custom_call.1']
    #allocation8 [shape = 'u8[8192]{0}', space=vmem, size = 0x2000, scoped, tag = 'output window, operand 0']
    %8 = vsyncpa [#allocation4], 0
    %s9 = scalar_lea.sflag [#allocation4], 1
    %10 = vsyncpa %s9, 0
    %11 = vsyncpa [#allocation7], 0
    %s12 = scalar_lea.sflag [#allocation7], 1
    %13 = vsyncpa %s12, 0
    %14 = vsyncpa [#allocation5], 0
    %s15 = scalar_lea.sflag [#allocation5], 1
    %16 = vsyncpa %s15, 0
    loop: start=0, step=1, limit=4
    $region2: #{tpu_custom_call.1} parent=1 // loop_pre_header
      _
    $region3: #{tpu_custom_call.1} parent=1 // loop_header
      %s18 = sphi 0, %s22
      %p19 = scmp.ge.s32.totalorder %s18, 4
      %s25 = sphi 0, %s37
      %s26 = sphi 0, %s33
      %s27 = sphi 0, %s25
      %s28 = sphi 0, %s26
      %s29 = sphi 0, %s27
      %s30 = sphi 0, %s28
      %s42 = sphi 0, %s44
      %s45 = sphi 0, %s42
      %s46 = sphi 0, %s45
      %s62 = sphi 0, %s46
      %s68 = sphi 0, %s70
      %s71 = sphi 0, %s68
      %s72 = sphi 0, %s71
      %s88 = sphi 0, %s72
      %s94 = sphi 0, %s96
      %s97 = sphi 0, %s94
      %s98 = sphi 0, %s97
      %s114 = sphi 0, %s98
      %s122 = sphi 0, %s124
      %s125 = sphi 0, %s122
      %s126 = sphi 0, %s125
      %s142 = sphi 0, %s126
    $region4: #{tpu_custom_call.1} parent=1 // loop_header_branch
      %21 = sbr.rel (%p19) target = $region8
    $region5: #{tpu_custom_call.1} parent=1 // loop_body
      %s23 = ssub.s32 %s18, 1
      %s24 = ssub.s32 %s18, 2
      %s31 = sadd.s32 1, %s26
      %p32 = scmp.ge.s32.totalorder %s31, 1
      %s33 = scalar_select %p32, 0, %s31
      %s34 = sadd.s32 1, %s25
      %s35 = scalar_select %p32, %s34, %s25
      %p36 = scmp.ge.s32.totalorder %s35, 2
      %s37 = scalar_select %p36, 0, %s35
      %s38 = ssub.s32 %s26, %s33
      %s39 = ssub.s32 %s25, %s37
      %s40 = sor.u32 %s38, %s39
      %p41 = scmp.eq.s32.totalorder %s40, 0
      %s43 = sadd.s32 %s42, 1
      %s44 = scalar_select %p41, %s42, %s43
      %p47 = pneg %p41
      %p48 = scmp.eq.s32.totalorder %s18, 1
      %p49 = por %p47, %p48
      %p50 = scmp.ne.s32.totalorder %s42, %s45
      %p51 = scmp.eq.s32.totalorder %s18, 0
      %p52 = por %p50, %p51
      %p53 = scmp.ne.s32.totalorder %s42, %s45
      %p54 = scmp.eq.s32.totalorder %s23, 1
      %p55 = por %p53, %p54
      %p56 = scmp.ne.s32.totalorder %s45, %s46
      %p57 = scmp.eq.s32.totalorder %s23, 0
      %p58 = por %p56, %p57
      %p59 = scmp.ne.s32.totalorder %s45, %s46
      %p60 = scmp.eq.s32.totalorder %s24, 1
      %p61 = por %p59, %p60
      %p63 = scmp.ne.s32.totalorder %s46, %s62
      %p64 = scmp.eq.s32.totalorder %s24, 0
      %p65 = por %p63, %p64
      %s66 = ssub.s32 %s25, %s37
      %p67 = scmp.eq.s32.totalorder %s66, 0
      %s69 = sadd.s32 %s68, 1
      %s70 = scalar_select %p67, %s68, %s69
      %p73 = pneg %p67
      %p74 = scmp.eq.s32.totalorder %s18, 1
      %p75 = por %p73, %p74
      %p76 = scmp.ne.s32.totalorder %s68, %s71
      %p77 = scmp.eq.s32.totalorder %s18, 0
      %p78 = por %p76, %p77
      %p79 = scmp.ne.s32.totalorder %s68, %s71
      %p80 = scmp.eq.s32.totalorder %s23, 1
      %p81 = por %p79, %p80
      %p82 = scmp.ne.s32.totalorder %s71, %s72
      %p83 = scmp.eq.s32.totalorder %s23, 0
      %p84 = por %p82, %p83
      %p85 = scmp.ne.s32.totalorder %s71, %s72
      %p86 = scmp.eq.s32.totalorder %s24, 1
      %p87 = por %p85, %p86
      %p89 = scmp.ne.s32.totalorder %s72, %s88
      %p90 = scmp.eq.s32.totalorder %s24, 0
      %p91 = por %p89, %p90
      %s92 = ssub.s32 %s25, %s37
      %p93 = scmp.eq.s32.totalorder %s92, 0
      %s95 = sadd.s32 %s94, 1
      %s96 = scalar_select %p93, %s94, %s95
      %p99 = pneg %p93
      %p100 = scmp.eq.s32.totalorder %s18, 1
      %p101 = por %p99, %p100
      %p102 = scmp.ne.s32.totalorder %s94, %s97
      %p103 = scmp.eq.s32.totalorder %s18, 0
      %p104 = por %p102, %p103
      %p105 = scmp.ne.s32.totalorder %s94, %s97
      %p106 = scmp.eq.s32.totalorder %s23, 1
      %p107 = por %p105, %p106
      %p108 = scmp.ne.s32.totalorder %s97, %s98
      %p109 = scmp.eq.s32.totalorder %s23, 0
      %p110 = por %p108, %p109
      %p111 = scmp.ne.s32.totalorder %s97, %s98
      %p112 = scmp.eq.s32.totalorder %s24, 1
      %p113 = por %p111, %p112
      %p115 = scmp.ne.s32.totalorder %s98, %s114
      %p116 = scmp.eq.s32.totalorder %s24, 0
      %p117 = por %p115, %p116
      %s118 = ssub.s32 %s26, %s33
      %s119 = ssub.s32 %s25, %s37
      %s120 = sor.u32 %s118, %s119
      %p121 = scmp.eq.s32.totalorder %s120, 0
      %s123 = sadd.s32 %s122, 1
      %s124 = scalar_select %p121, %s122, %s123
      %p127 = pneg %p121
      %p128 = scmp.eq.s32.totalorder %s18, 1
      %p129 = por %p127, %p128
      %p130 = scmp.ne.s32.totalorder %s122, %s125
      %p131 = scmp.eq.s32.totalorder %s18, 0
      %p132 = por %p130, %p131
      %p133 = scmp.ne.s32.totalorder %s122, %s125
      %p134 = scmp.eq.s32.totalorder %s23, 1
      %p135 = por %p133, %p134
      %p136 = scmp.ne.s32.totalorder %s125, %s126
      %p137 = scmp.eq.s32.totalorder %s23, 0
      %p138 = por %p136, %p137
      %p139 = scmp.ne.s32.totalorder %s125, %s126
      %p140 = scmp.eq.s32.totalorder %s24, 1
      %p141 = por %p139, %p140
      %p143 = scmp.ne.s32.totalorder %s126, %s142
      %p144 = scmp.eq.s32.totalorder %s24, 0
      %p145 = por %p143, %p144
      %p146 = scmp.le.s32.totalorder 1, %s18
      %p147 = scmp.lt.s32.totalorder %s18, 3
      %p148 = pnand %p146, %p147
      %p149 = pneg %p148
      // Predicated region
      $region9: #{tpu_custom_call.1} parent=5 // pred_check
        _
      $region10: #{tpu_custom_call.1} parent=5 // pred_check_branch
        %151 = sbr.rel (%p148) target = $region12
      $region11: #{tpu_custom_call.1} parent=5 // pred_region
        %s152 = ssub.s32 %s18, 1
      $region12: #{tpu_custom_call.1} parent=5 // pred_fallthru
        _
      %p153 = scmp.lt.s32.totalorder %s18, 2
      // Predicated region
      $region13: #{tpu_custom_call.1} parent=5 // pred_check
        %p154 = pneg %p153
      $region14: #{tpu_custom_call.1} parent=5 // pred_check_branch
        %156 = sbr.rel (%p154) target = $region16
      $region15: #{tpu_custom_call.1} parent=5 // pred_region
        // Predicated region
        $region17: #{tpu_custom_call.1} parent=15 // pred_check
          %p157 = pneg %p52
        $region18: #{tpu_custom_call.1} parent=15 // pred_check_branch
          %159 = sbr.rel (%p157) target = $region20
        $region19: #{tpu_custom_call.1} parent=15 // pred_region
          %s160 = sand.u32 %s42, 1
          %s161 = scalar_lea.sflag [#allocation4], %s160
          %s162 = sand.u32 %s42, 1
          %s163 = smul.addr %s162, 8
          %s164 = scalar_lea.vmem [#allocation3], %s163
          %s166 = ssub.s32 128, 128
          %167 = vsyncadd %s161, %s166
          %s168 = smul.addr %s26, 2
          %s169 = sadd.s32 %s25, %s168
          %s170 = smul.addr %s169, 128
          %s171 = scalar_lea.hbm %s0, %s170
          %s173 = sshll.u32 %s164, 4
          %s174 = int_to_ptr.vmem [resolvable:$true] %s173
          %176 = dma.hbm_to_vmem [thread:$0]  %s171, 128, %s174, %s161
        $region20: #{tpu_custom_call.1} parent=15 // pred_fallthru
          _
        // Predicated region
        $region21: #{tpu_custom_call.1} parent=15 // pred_check
          %p177 = pneg %p78
        $region22: #{tpu_custom_call.1} parent=15 // pred_check_branch
          %179 = sbr.rel (%p177) target = $region24
        $region23: #{tpu_custom_call.1} parent=15 // pred_region
          %s180 = sand.u32 %s68, 1
          %s181 = scalar_lea.sflag [#allocation7], %s180
          %s182 = sand.u32 %s68, 1
          %s183 = smul.addr %s182, 4
          %s184 = scalar_lea.vmem [#allocation6], %s183
          %s186 = ssub.s32 64, 64
          %187 = vsyncadd %s181, %s186
          %s188 = smul.addr %s25, 64
          %s189 = scalar_lea.hbm %s1, %s188
          %s191 = sshll.u32 %s184, 4
          %s192 = int_to_ptr.vmem [resolvable:$true] %s191
          %194 = dma.hbm_to_vmem [thread:$0]  %s189, 64, %s192, %s181
        $region24: #{tpu_custom_call.1} parent=15 // pred_fallthru
          _
        // Predicated region
        $region25: #{tpu_custom_call.1} parent=15 // pred_check
          %p195 = pneg %p104
        $region26: #{tpu_custom_call.1} parent=15 // pred_check_branch
          %197 = sbr.rel (%p195) target = $region28
        $region27: #{tpu_custom_call.1} parent=15 // pred_region
          %p198 = scmp.lt.s32.totalorder %s25, 1
          %s199 = scalar_select %p198, %s25, 1
          %s200 = scalar_lea.vmem %s2, %s199
        $region28: #{tpu_custom_call.1} parent=15 // pred_fallthru
          _
      $region16: #{tpu_custom_call.1} parent=5 // pred_fallthru
        _
      %p201 = scmp.le.s32.totalorder 1, %s18
      %p202 = scmp.lt.s32.totalorder %s18, 3
      %p203 = pnand %p201, %p202
      %p204 = pneg %p203
      // Predicated region
      $region29: #{tpu_custom_call.1} parent=5 // pred_check
        _
      $region30: #{tpu_custom_call.1} parent=5 // pred_check_branch
        %206 = sbr.rel (%p203) target = $region32
      $region31: #{tpu_custom_call.1} parent=5 // pred_region
        %s207 = ssub.s32 %s18, 1
        %s208 = sand.u32 %s45, 1
        %s209 = scalar_lea.sflag [#allocation4], %s208
        %s210 = sand.u32 %s45, 1
        %s211 = smul.addr %s210, 8
        %s212 = scalar_lea.vmem [#allocation3], %s211
        // Predicated region
        $region33: #{tpu_custom_call.1} parent=31 // pred_check
          %p213 = pneg %p58
        $region34: #{tpu_custom_call.1} parent=31 // pred_check_branch
          %215 = sbr.rel (%p213) target = $region36
        $region35: #{tpu_custom_call.1} parent=31 // pred_region
          %216 = dma.done %s209, 128
        $region36: #{tpu_custom_call.1} parent=31 // pred_fallthru
          _
        %s217 = sand.u32 %s71, 1
        %s218 = scalar_lea.sflag [#allocation7], %s217
        %s219 = sand.u32 %s71, 1
        %s220 = smul.addr %s219, 4
        %s221 = scalar_lea.vmem [#allocation6], %s220
        // Predicated region
        $region37: #{tpu_custom_call.1} parent=31 // pred_check
          %p222 = pneg %p84
        $region38: #{tpu_custom_call.1} parent=31 // pred_check_branch
          %224 = sbr.rel (%p222) target = $region40
        $region39: #{tpu_custom_call.1} parent=31 // pred_region
          %225 = dma.done %s218, 64
        $region40: #{tpu_custom_call.1} parent=31 // pred_fallthru
          _
        %s226 = sand.u32 %s45, 1
        %s227 = scalar_lea.sflag [#allocation4], %s226
        %s228 = sand.u32 %s45, 1
        %s229 = smul.addr %s228, 8
        %s230 = scalar_lea.vmem [#allocation3], %s229
        %p231 = pneg %p58
        %p232 = pneg %p55
        %s233 = sand.u32 %s71, 1
        %s234 = scalar_lea.sflag [#allocation7], %s233
        %s235 = sand.u32 %s71, 1
        %s236 = smul.addr %s235, 4
        %s237 = scalar_lea.vmem [#allocation6], %s236
        %p238 = pneg %p84
        %p239 = pneg %p81
        %p240 = scmp.lt.s32.totalorder %s27, 1
        %s241 = scalar_select %p240, %s27, 1
        %s242 = scalar_lea.vmem %s2, %s241
        %p243 = pneg %p110
        %p244 = pneg %p107
        %p245 = pneg %p138
        %p246 = pneg %p135
        %s247 = sand.u32 %s125, 1
        %s248 = scalar_lea.sflag [#allocation5], %s247
        %s249 = sand.u32 %s125, 1
        %s250 = smul.addr %s249, 8
        %s251 = scalar_lea.vmem [#allocation8], %s250
        %p252 = scmp.lt.s32.totalorder %s27, 1
        %s253 = scalar_select %p252, %s27, 1
        %s254 = scalar_lea.vmem %s2, %s253
        %v255 = vld [vmem:[%s212] sm:$0xff]
        %v256 = vld [vmem:[%s221] sm:$0x7]
        %v257 = vld [vmem:[%s254] sm:$0x1]
        %p258 = scmp.eq.s32.totalorder %s28, 0
        // Predicated region
        $region41: #{tpu_custom_call.1} parent=31 // pred_check
          %p259 = pneg %p258
        $region42: #{tpu_custom_call.1} parent=31 // pred_check_branch
          %261 = sbr.rel (%p259) target = $region44
        $region43: #{tpu_custom_call.1} parent=31 // pred_region
          %262 = vst [vmem:[#allocation2] sm:$0x3] 0.0
        $region44: #{tpu_custom_call.1} parent=31 // pred_fallthru
          _
        %v263 = vld [vmem:[#allocation2] sm:$0x3]
        %v265 = vlaneseq
        %v266 = vshrl.u32 %v265, 7
        %v267 = vsub.s32 0, %v266
        %v268 = vrot.slane %v257, %v267
        %v270 = vrot.slane %v255, 6
        %v271 = vlaneseq
        %v272 = vshrl.u32 %v271, 7
        %v273 = vsub.s32 0, %v272
        %v274 = vrot.slane %v256, %v273
        %v275 = vmul.f32 %v270, %v274
        %v276 = vadd.f32 %v268, %v275
        %v277 = vrot.slane %v255, 7
        %v278 = vlaneseq
        %v279 = vshrl.u32 %v278, 7
        %v280 = vsub.s32 1, %v279
        %v281 = vrot.slane %v256, %v280
        %v282 = vmul.f32 %v277, %v281
        %v283 = vadd.f32 %v276, %v282
        %v284 = vlaneseq
        %v285 = vshrl.u32 %v284, 7
        %v286 = vsub.s32 2, %v285
        %v287 = vrot.slane %v256, %v286
        %v288 = vmul.f32 %v255, %v287
        %v289 = vadd.f32 %v283, %v288
        %290 = vst [vmem:[%s251] sm:$0xff] %v289
        %v291 = vmul.f32 %v263, %v256
        %v292 = vadd.f32 %v257, %v291
        %v295 = vunpack.c.l.s4 1966171168
        %v296 = vunpack.c.0.s8 %v295
        %v297 = vlaneseq
        %v298 = vshrl.u32 %v297, 7
        %v299 = vsub.s32 %v296, %v298
        %v300 = vrot.slane %v291, %v299
        %v301 = vcombine.high %v300, %v300
        %v303 = vunpack.c.l.s4 1966171168
        %v304 = vunpack.c.0.s8 %v303
        %v305 = vlaneseq
        %v306 = vshrl.u32 %v305, 7
        %v307 = vsub.s32 %v304, %v306
        %v308 = vrot.slane %v301, %v307
        %v310 = vadd.f32 %v292, %v308
        %v312 = vrot.slane %v256, 2
        %v314 = vmul.f32 %v255, %v312
        %v315 = vadd.f32 %v310, %v314
        %316 = vst [vmem:[%s251] sm:$0x1] %v315
        %v317 = vrot.slane %v256, 7
        %v319 = vmul.f32 %v263, %v317
        %v322 = vunpack.c.l.s4 1966171168
        %v323 = vunpack.c.0.s8 %v322
        %v324 = vlaneseq
        %v325 = vshrl.u32 %v324, 7
        %v326 = vsub.s32 %v323, %v325
        %v327 = vrot.slane %v319, %v326
        %v328 = vcombine.high %v327, %v327
        %v330 = vunpack.c.l.s4 1966171168
        %v331 = vunpack.c.0.s8 %v330
        %v332 = vlaneseq
        %v333 = vshrl.u32 %v332, 7
        %v334 = vsub.s32 %v331, %v333
        %v335 = vrot.slane %v328, %v334
        %v337 = vadd.f32 %v257, %v335
        %v338 = vrot.slane %v256, 1
        %v340 = vmul.f32 %v255, %v338
        %v341 = vadd.f32 %v337, %v340
        %v344 = vunpack.c.l.s4 1966171168
        %v345 = vunpack.c.0.s8 %v344
        %v346 = vlaneseq
        %v347 = vshrl.u32 %v346, 7
        %v348 = vsub.s32 %v345, %v347
        %v349 = vrot.slane %v340, %v348
        %v350 = vcombine.high %v349, %v349
        %v352 = vunpack.c.l.s4 1966171168
        %v353 = vunpack.c.0.s8 %v352
        %v354 = vlaneseq
        %v355 = vshrl.u32 %v354, 7
        %v356 = vsub.s32 %v353, %v355
        %v357 = vrot.slane %v350, %v356
        %v359 = vadd.f32 %v341, %v357
        %360 = vst [vmem:[%s251 + $0x1] sm:$0x1] %v359
        %361 = vst [vmem:[#allocation2 - $0x6] sm:$0xc0] %v255
        %s362 = sand.u32 %s125, 1
        %s363 = scalar_lea.sflag [#allocation5], %s362
        %s364 = sand.u32 %s125, 1
        %s365 = smul.addr %s364, 8
        %s366 = scalar_lea.vmem [#allocation8], %s365
        // Predicated region
        $region45: #{tpu_custom_call.1} parent=31 // pred_check
          %p367 = pneg %p135
        $region46: #{tpu_custom_call.1} parent=31 // pred_check_branch
          %369 = sbr.rel (%p367) target = $region48
        $region47: #{tpu_custom_call.1} parent=31 // pred_region
          %s371 = ssub.s32 128, 128
          %372 = vsyncadd %s363, %s371
          %s373 = smul.addr %s28, 2
          %s374 = sadd.s32 %s27, %s373
          %s375 = smul.addr %s374, 128
          %s376 = scalar_lea.hbm %s3, %s375
          %s378 = sshll.u32 %s366, 4
          %s379 = int_to_ptr.vmem [resolvable:$true] %s378
          %381 = dma.vmem_to_hbm [thread:$0]  %s379, 128, %s376, %s363
        $region48: #{tpu_custom_call.1} parent=31 // pred_fallthru
          _
      $region32: #{tpu_custom_call.1} parent=5 // pred_fallthru
        _
      %p382 = scmp.le.s32.totalorder 2, %s18
      // Predicated region
      $region49: #{tpu_custom_call.1} parent=5 // pred_check
        %p383 = pneg %p382
      $region50: #{tpu_custom_call.1} parent=5 // pred_check_branch
        %385 = sbr.rel (%p383) target = $region52
      $region51: #{tpu_custom_call.1} parent=5 // pred_region
        %s386 = ssub.s32 %s18, 2
        // Predicated region
        $region53: #{tpu_custom_call.1} parent=51 // pred_check
          %p387 = pneg %p141
        $region54: #{tpu_custom_call.1} parent=51 // pred_check_branch
          %389 = sbr.rel (%p387) target = $region56
        $region55: #{tpu_custom_call.1} parent=51 // pred_region
          %s390 = sand.u32 %s126, 1
          %s391 = scalar_lea.sflag [#allocation5], %s390
          %s392 = sand.u32 %s126, 1
          %s393 = smul.addr %s392, 8
          %s394 = scalar_lea.vmem [#allocation8], %s393
          %395 = dma.done %s391, 128
        $region56: #{tpu_custom_call.1} parent=51 // pred_fallthru
          _
      $region52: #{tpu_custom_call.1} parent=5 // pred_fallthru
        _
    $region6: #{tpu_custom_call.1} parent=1 // loop_footer
      %s22 = sadd.s32 1, %s18
    $region7: #{tpu_custom_call.1} parent=1 // loop_footer_branch
      %17 = sbr.rel target = $region3
    $region8: #{tpu_custom_call.1} parent=1 // loop_exit
      _
    %396 = vsyncpa [#allocation4], 1
    %s397 = scalar_lea.sflag [#allocation4], 1
    %398 = vsyncpa %s397, 1
    %399 = vsyncpa [#allocation7], 1
    %s400 = scalar_lea.sflag [#allocation7], 1
    %401 = vsyncpa %s400, 1
    %402 = vsyncpa [#allocation5], 1
    %s403 = scalar_lea.sflag [#allocation5], 1
    %404 = vsyncpa %s403, 1

</llo_original>
